<compile_context>
chip_gen: v6e
topology: v6e:2x2x1
jax: 0.10.0
libtpu: 0.0.40
codegen_flags: <defaults>
</compile_context>

<pallas_src>
import numpy as np
import jax
import jax.numpy as jnp
from jax import lax
from jax.experimental import pallas as pl
from jax.experimental.pallas import tpu as pltpu

HIDDEN = 64    # module's hidden width (spec)
H_PAD = 128    # lane-dense padded hidden width (zero-padded, math exact)


def _round_up(a, m):
    return pl.cdiv(a, m) * m


def _pad2(a, rows, cols):
    return jnp.pad(a, ((0, rows - a.shape[0]), (0, cols - a.shape[1])))


def _mlp_kernel(x_ref, w1_ref, w23_ref, b123_ref, w4t_ref, b4t_ref, out_ref):
    # Hidden layers: bf16 MXU operands, f32 accumulation, f32 bias/ReLU.
    x = x_ref[...].astype(jnp.bfloat16)

    h = jnp.dot(x, w1_ref[...], preferred_element_type=jnp.float32)
    h = jnp.maximum(h + b123_ref[0:1, :], 0.0)

    h = jnp.dot(h.astype(jnp.bfloat16), w23_ref[0],
                preferred_element_type=jnp.float32)
    h = jnp.maximum(h + b123_ref[1:2, :], 0.0)

    h = jnp.dot(h.astype(jnp.bfloat16), w23_ref[1],
                preferred_element_type=jnp.float32)
    h = jnp.maximum(h + b123_ref[2:3, :], 0.0)

    # Value head in f32, emitted transposed: [out8, tb] = w4t @ h^T + b4t.
    # (NT contraction, same structure as the Q @ K^T attention matmul.)
    vt = lax.dot_general(w4t_ref[...], h,
                         dimension_numbers=(((1,), (1,)), ((), ())),
                         preferred_element_type=jnp.float32)
    out_ref[...] = vt + b4t_ref[...]


def prepare_kernel_params(p):
    """Pad f32 reference params to lane-dense shapes; bf16 hidden weights,
    f32 head; stack w2/w3 and b1..b3 to cut pallas_call operand count."""
    in_dim = p["w1"].shape[0]
    out_dim = p["w4"].shape[1]
    out8 = max(8, _round_up(out_dim, 8))

    w1p = _pad2(p["w1"], in_dim, H_PAD).astype(jnp.bfloat16)
    w2p = _pad2(p["w2"], H_PAD, H_PAD).astype(jnp.bfloat16)
    w3p = _pad2(p["w3"], H_PAD, H_PAD).astype(jnp.bfloat16)
    w23 = jnp.stack([w2p, w3p], axis=0)                       # [2,128,128] bf16

    b123 = jnp.concatenate([_pad2(p["b1"], 1, H_PAD),
                            _pad2(p["b2"], 1, H_PAD),
                            _pad2(p["b3"], 1, H_PAD)], axis=0)  # [3,128] f32

    w4t = _pad2(p["w4"].T, out8, H_PAD)                       # [out8,128] f32
    b4t = _pad2(p["b4"].T, out8, 1)                           # [out8,1]   f32

    return {"out_dim": out_dim, "out8": out8,
            "w1p": w1p, "w23": w23, "b123": b123, "w4t": w4t, "b4t": b4t}


def state_value_residual_forward(x, kparams, *, tb=1024):
    """x: [B, in_dim] f32.  kparams: output of prepare_kernel_params."""
    B, in_dim = x.shape
    out_dim = kparams["out_dim"]
    out8 = kparams["out8"]

    # Batch tiling: small B -> single full-array block; otherwise large tiles
    # with at least 2 grid steps (keeps both v7x TensorCores busy).
    if B <= 128:
        tb_eff, b_pad = B, B
    else:
        tb_eff = min(tb, _round_up(pl.cdiv(B, 2), 128))
        b_pad = _round_up(B, tb_eff)
    grid = (b_pad // tb_eff,)

    w1p, w23, b123, w4t, b4t = (kparams["w1p"], kparams["w23"],
                                kparams["b123"], kparams["w4t"], kparams["b4t"])

    in_specs = [
        pl.BlockSpec((tb_eff, in_dim), lambda i: (i, 0)),        # x (batch-tiled)
        pl.BlockSpec(w1p.shape, lambda i: (0, 0)),               # resident weights
        pl.BlockSpec(w23.shape, lambda i: (0, 0, 0)),
        pl.BlockSpec(b123.shape, lambda i: (0, 0)),
        pl.BlockSpec(w4t.shape, lambda i: (0, 0)),
        pl.BlockSpec(b4t.shape, lambda i: (0, 0)),
    ]
    out_spec = pl.BlockSpec((out8, tb_eff), lambda i: (0, i))

    flops = int(2 * b_pad * (in_dim * H_PAD + 2 * H_PAD * H_PAD + H_PAD * out8))
    bytes_accessed = int(
        B * in_dim * 4                                           # x (f32)
        + (in_dim * H_PAD + 2 * H_PAD * H_PAD) * 2               # hidden weights (bf16)
        + (3 * H_PAD) * 4                                        # hidden biases (f32)
        + (out8 * H_PAD + out8) * 4                              # head (f32)
        + out8 * b_pad * 4                                       # output (f32, transposed)
    )

    out_t = pl.pallas_call(
        _mlp_kernel,
        out_shape=jax.ShapeDtypeStruct((out8, b_pad), jnp.float32),
        grid=grid,
        in_specs=in_specs,
        out_specs=out_spec,
        compiler_params=pltpu.CompilerParams(
            dimension_semantics=("parallel",)),
        cost_estimate=pl.CostEstimate(
            flops=flops, transcendentals=0, bytes_accessed=bytes_accessed),
    )(x, w1p, w23, b123, w4t, b4t)

    # Tiny slice + transpose back to [B, out_dim].
    return out_t[:out_dim, :B].T


def init_params(key, in_dim, out_dim, hidden=HIDDEN):
    """f32 reference params mirroring the PyTorch module.

    Weights stored transposed vs torch ([fan_in, fan_out]); v_out zero-init."""
    def linear_init(key, fan_in, fan_out):
        kw, kb = jax.random.split(key)
        bound = 1.0 / np.sqrt(fan_in)
        w = jax.random.uniform(kw, (fan_in, fan_out), jnp.float32, -bound, bound)
        b = jax.random.uniform(kb, (1, fan_out), jnp.float32, -bound, bound)
        return w, b

    k1, k2, k3 = jax.random.split(key, 3)
    w1, b1 = linear_init(k1, in_dim, hidden)
    w2, b2 = linear_init(k2, hidden, hidden)
    w3, b3 = linear_init(k3, hidden, hidden)
    w4 = jnp.zeros((hidden, out_dim), jnp.float32)   # v_out.weight = 0 (spec)
    b4 = jnp.zeros((1, out_dim), jnp.float32)        # v_out.bias = 0 (spec)
    return {"w1": w1, "b1": b1, "w2": w2, "b2": b2,
            "w3": w3, "b3": b3, "w4": w4, "b4": b4}


def reference_forward(x, params):
    """Pure-JAX f32 reference for correctness check."""
    h = jnp.maximum(x @ params["w1"] + params["b1"], 0.0)
    h = jnp.maximum(h @ params["w2"] + params["b2"], 0.0)
    h = jnp.maximum(h @ params["w3"] + params["b3"], 0.0)
    return h @ params["w4"] + params["b4"]


if __name__ == "__main__":
    in_dim, out_dim = 16, 4

    key = jax.random.PRNGKey(0)
    kx, kp, kh = jax.random.split(key, 3)

    params = init_params(kp, in_dim, out_dim)

    # Case 1: spec-faithful params (zero-init value head), small batch
    # (single full-array block, no grid tiling).
    B = 8
    x = jax.random.normal(kx, (B, in_dim), dtype=jnp.float32)
    kparams = prepare_kernel_params(params)
    out = jax.block_until_ready(state_value_residual_forward(x, kparams))
    ref = reference_forward(x, params)
    np.testing.assert_allclose(np.asarray(out), np.asarray(ref), rtol=2e-2, atol=2e-2)
    assert out.shape == (B, out_dim)

    # Case 2: non-zero head + uneven larger batch (exercises the >=2-step batch
    # grid, the clamped partial last input block, and the transposed output).
    khw, khb, kx2 = jax.random.split(kh, 3)
    params2 = dict(params)
    params2["w4"] = jax.random.uniform(khw, (HIDDEN, out_dim), jnp.float32, -0.125, 0.125)
    params2["b4"] = jax.random.uniform(khb, (1, out_dim), jnp.float32, -0.125, 0.125)
    B2 = 200
    x2 = jax.random.normal(kx2, (B2, in_dim), dtype=jnp.float32)
    kparams2 = prepare_kernel_params(params2)
    out2 = jax.block_until_ready(state_value_residual_forward(x2, kparams2))
    ref2 = reference_forward(x2, params2)
    np.testing.assert_allclose(np.asarray(out2), np.asarray(ref2), rtol=2e-2, atol=2e-2)
    assert out2.shape == (B2, out_dim)

    print("KERNEL_OK")
</pallas_src>

<mosaic_0001>
module attributes {stable_mosaic.version = 11 : i64} {
  func.func @_mlp_kernel(%arg0: i32, %arg1: memref<8x16xf32, #tpu.memory_space<vmem>>, %arg2: memref<16x128xbf16, #tpu.memory_space<vmem>>, %arg3: memref<2x128x128xbf16, #tpu.memory_space<vmem>>, %arg4: memref<3x128xf32, #tpu.memory_space<vmem>>, %arg5: memref<8x128xf32, #tpu.memory_space<vmem>>, %arg6: memref<8x1xf32, #tpu.memory_space<vmem>>, %arg7: memref<8x8xf32, #tpu.memory_space<vmem>>) attributes {dimension_semantics = [#tpu.dimension_semantics<parallel>], iteration_bounds = array<i64: 1>, scalar_prefetch = 0 : i64, scratch_operands = 0 : i64, tpu.core_type = #tpu.core_type<tc>, window_params = [{transform_indices = @transform_0, window_bounds = array<i64: 8, 16>}, {pipeline_mode = #tpu.pipeline_mode<synchronous>, transform_indices = @transform_1, window_bounds = array<i64: 16, 128>}, {pipeline_mode = #tpu.pipeline_mode<synchronous>, transform_indices = @transform_2, window_bounds = array<i64: 2, 128, 128>}, {pipeline_mode = #tpu.pipeline_mode<synchronous>, transform_indices = @transform_3, window_bounds = array<i64: 3, 128>}, {pipeline_mode = #tpu.pipeline_mode<synchronous>, transform_indices = @transform_4, window_bounds = array<i64: 8, 128>}, {pipeline_mode = #tpu.pipeline_mode<synchronous>, transform_indices = @transform_5, window_bounds = array<i64: 8, 1>}, {transform_indices = @transform_6, window_bounds = array<i64: 8, 8>}]} {
    %c0 = arith.constant 0 : index
    %c0_0 = arith.constant 0 : index
    %0 = vector.load %arg1[%c0, %c0_0] : memref<8x16xf32, #tpu.memory_space<vmem>>, vector<8x16xf32>
    %1 = arith.truncf %0 : vector<8x16xf32> to vector<8x16xbf16>
    %c0_1 = arith.constant 0 : index
    %c0_2 = arith.constant 0 : index
    %2 = vector.load %arg2[%c0_1, %c0_2] : memref<16x128xbf16, #tpu.memory_space<vmem>>, vector<16x128xbf16>
    %cst = arith.constant dense<0.000000e+00> : vector<8x128xf32>
    %3 = tpu.matmul %1, %2, %cst {dimension_numbers = #tpu.dot_dimension_numbers<[1], [0], [0], [1], [0, 0, 1, 1], [], []>} : vector<8x16xbf16>, vector<16x128xbf16>, vector<8x128xf32> -> vector<8x128xf32>
    %c0_3 = arith.constant 0 : index
    %c0_4 = arith.constant 0 : index
    %4 = vector.load %arg4[%c0_3, %c0_4] : memref<3x128xf32, #tpu.memory_space<vmem>>, vector<1x128xf32>
    %5 = vector.broadcast %4 : vector<1x128xf32> to vector<8x128xf32>
    %6 = arith.addf %3, %5 : vector<8x128xf32>
    %cst_5 = arith.constant 0.000000e+00 : f32
    %7 = vector.broadcast %cst_5 : f32 to vector<8x128xf32>
    %8 = arith.maximumf %6, %7 : vector<8x128xf32>
    %9 = arith.truncf %8 : vector<8x128xf32> to vector<8x128xbf16>
    %c0_6 = arith.constant 0 : index
    %c0_7 = arith.constant 0 : index
    %c0_8 = arith.constant 0 : index
    %10 = vector.load %arg3[%c0_6, %c0_7, %c0_8] : memref<2x128x128xbf16, #tpu.memory_space<vmem>>, vector<1x128x128xbf16>
    %11 = vector.shape_cast %10 : vector<1x128x128xbf16> to vector<128x128xbf16>
    %cst_9 = arith.constant dense<0.000000e+00> : vector<8x128xf32>
    %12 = tpu.matmul %9, %11, %cst_9 {dimension_numbers = #tpu.dot_dimension_numbers<[1], [0], [0], [1], [0, 0, 1, 1], [], []>} : vector<8x128xbf16>, vector<128x128xbf16>, vector<8x128xf32> -> vector<8x128xf32>
    %c1 = arith.constant 1 : index
    %c0_10 = arith.constant 0 : index
    %13 = vector.load %arg4[%c1, %c0_10] : memref<3x128xf32, #tpu.memory_space<vmem>>, vector<1x128xf32>
    %14 = vector.broadcast %13 : vector<1x128xf32> to vector<8x128xf32>
    %15 = arith.addf %12, %14 : vector<8x128xf32>
    %cst_11 = arith.constant 0.000000e+00 : f32
    %16 = vector.broadcast %cst_11 : f32 to vector<8x128xf32>
    %17 = arith.maximumf %15, %16 : vector<8x128xf32>
    %18 = arith.truncf %17 : vector<8x128xf32> to vector<8x128xbf16>
    %c1_12 = arith.constant 1 : index
    %c0_13 = arith.constant 0 : index
    %c0_14 = arith.constant 0 : index
    %19 = vector.load %arg3[%c1_12, %c0_13, %c0_14] : memref<2x128x128xbf16, #tpu.memory_space<vmem>>, vector<1x128x128xbf16>
    %20 = vector.shape_cast %19 : vector<1x128x128xbf16> to vector<128x128xbf16>
    %cst_15 = arith.constant dense<0.000000e+00> : vector<8x128xf32>
    %21 = tpu.matmul %18, %20, %cst_15 {dimension_numbers = #tpu.dot_dimension_numbers<[1], [0], [0], [1], [0, 0, 1, 1], [], []>} : vector<8x128xbf16>, vector<128x128xbf16>, vector<8x128xf32> -> vector<8x128xf32>
    %c2 = arith.constant 2 : index
    %c0_16 = arith.constant 0 : index
    %22 = vector.load %arg4[%c2, %c0_16] : memref<3x128xf32, #tpu.memory_space<vmem>>, vector<1x128xf32>
    %23 = vector.broadcast %22 : vector<1x128xf32> to vector<8x128xf32>
    %24 = arith.addf %21, %23 : vector<8x128xf32>
    %cst_17 = arith.constant 0.000000e+00 : f32
    %25 = vector.broadcast %cst_17 : f32 to vector<8x128xf32>
    %26 = arith.maximumf %24, %25 : vector<8x128xf32>
    %c0_18 = arith.constant 0 : index
    %c0_19 = arith.constant 0 : index
    %27 = vector.load %arg5[%c0_18, %c0_19] : memref<8x128xf32, #tpu.memory_space<vmem>>, vector<8x128xf32>
    %cst_20 = arith.constant dense<0.000000e+00> : vector<8x8xf32>
    %28 = tpu.matmul %27, %26, %cst_20 {dimension_numbers = #tpu.dot_dimension_numbers<[1], [1], [0], [0], [0, 0, 1, 0], [], []>} : vector<8x128xf32>, vector<8x128xf32>, vector<8x8xf32> -> vector<8x8xf32>
    %c0_21 = arith.constant 0 : index
    %c0_22 = arith.constant 0 : index
    %29 = vector.load %arg6[%c0_21, %c0_22] : memref<8x1xf32, #tpu.memory_space<vmem>>, vector<8x1xf32>
    %30 = vector.broadcast %29 : vector<8x1xf32> to vector<8x8xf32>
    %31 = arith.addf %28, %30 : vector<8x8xf32>
    %c0_23 = arith.constant 0 : index
    %c0_24 = arith.constant 0 : index
    %32 = vector.load %arg7[%c0_23, %c0_24] : memref<8x8xf32, #tpu.memory_space<vmem>>, vector<8x8xf32>
    tpu.vector_store %arg7[%c0_23, %c0_24], %31 {strides = array<i32>} : memref<8x8xf32, #tpu.memory_space<vmem>>, vector<8x8xf32>,
    return
  }
  func.func @transform_0(%arg0: i32) -> (i32, i32) {
    %c0_i32 = arith.constant 0 : i32
    %c0_i32_0 = arith.constant 0 : i32
    return %arg0, %c0_i32 : i32, i32
  }
  func.func @transform_1(%arg0: i32) -> (i32, i32) {
    %c0_i32 = arith.constant 0 : i32
    %c0_i32_0 = arith.constant 0 : i32
    %c0_i32_1 = arith.constant 0 : i32
    return %c0_i32, %c0_i32_0 : i32, i32
  }
  func.func @transform_2(%arg0: i32) -> (i32, i32, i32) {
    %c0_i32 = arith.constant 0 : i32
    %c0_i32_0 = arith.constant 0 : i32
    %c0_i32_1 = arith.constant 0 : i32
    %c0_i32_2 = arith.constant 0 : i32
    return %c0_i32, %c0_i32_0, %c0_i32_1 : i32, i32, i32
  }
  func.func @transform_3(%arg0: i32) -> (i32, i32) {
    %c0_i32 = arith.constant 0 : i32
    %c0_i32_0 = arith.constant 0 : i32
    %c0_i32_1 = arith.constant 0 : i32
    return %c0_i32, %c0_i32_0 : i32, i32
  }
  func.func @transform_4(%arg0: i32) -> (i32, i32) {
    %c0_i32 = arith.constant 0 : i32
    %c0_i32_0 = arith.constant 0 : i32
    %c0_i32_1 = arith.constant 0 : i32
    return %c0_i32, %c0_i32_0 : i32, i32
  }
  func.func @transform_5(%arg0: i32) -> (i32, i32) {
    %c0_i32 = arith.constant 0 : i32
    %c0_i32_0 = arith.constant 0 : i32
    %c0_i32_1 = arith.constant 0 : i32
    return %c0_i32, %c0_i32_0 : i32, i32
  }
  func.func @transform_6(%arg0: i32) -> (i32, i32) {
    %c0_i32 = arith.constant 0 : i32
    %c0_i32_0 = arith.constant 0 : i32
    return %c0_i32, %arg0 : i32, i32
  }
}

</mosaic_0001>

<llo_original>
// kernel: tpu_custom_call.1
$region0: #{tpu_custom_call.1}
  #allocation0 [shape = 'u32[]', space=smem, size = 0x4, offset = 0x4, fixed_abs, tag = 'smem constant byte address 0x4 - core index']
  #allocation1 [shape = 'u32[144,128]{1,0:T(1,128)}', space=vmem, size = 0x12000, scoped, tag = 'internal scratch']
  %s0 = inlined_call_operand.vmem [shape: f32[8,16], index: 0, kind: input, shape index: {}]
  %s1 = inlined_call_operand.hbm [shape: bf16[16,128], index: 1, kind: input, shape index: {}]
  %s2 = inlined_call_operand.hbm [shape: bf16[2,128,128], index: 2, kind: input, shape index: {}]
  %s3 = inlined_call_operand.hbm [shape: f32[3,128], index: 3, kind: input, shape index: {}]
  %s4 = inlined_call_operand.vmem [shape: f32[8,128], index: 4, kind: input, shape index: {}]
  %s5 = inlined_call_operand.vmem [shape: f32[8,1], index: 5, kind: input, shape index: {}]
  %s6 = inlined_call_operand.hbm [shape: f32[8,8], index: 6, kind: output, shape index: {}]
  %s7 = sld [smem:[#allocation0]]
  $region46: #{tpu_custom_call.1} parent=0
    _
  %s9 = ssub.s32 1, %s7
  %s10 = scalar_select 0, %s9, %s7
  $region1: #{tpu_custom_call.1} parent=0
    #allocation2 [shape = 'u8[4096]{0}', space=vmem, size = 0x1000, scoped, tag = 'input window, operand 1, single buffered']
    #allocation3 [shape = 's32[1]{0}', space=sflag, size = 0x4, scoped, tag = 'scoped memory for tpu_custom_call.1']
    #allocation4 [shape = 's32[1]{0}', space=sflag, size = 0x4, scoped, tag = 'scoped memory for tpu_custom_call.1']
    #allocation5 [shape = 'u8[65536]{0}', space=vmem, size = 0x10000, scoped, tag = 'input window, operand 2, single buffered']
    #allocation6 [shape = 's32[1]{0}', space=sflag, size = 0x4, scoped, tag = 'scoped memory for tpu_custom_call.1']
    #allocation7 [shape = 'u8[2048]{0}', space=vmem, size = 0x800, scoped, tag = 'input window, operand 3, single buffered']
    #allocation8 [shape = 'u8[4096]{0}', space=vmem, size = 0x1000, scoped, tag = 'output window, operand 0, single buffered']
    %11 = vsyncpa [#allocation3], 0
    %12 = vsyncpa [#allocation6], 0
    %13 = vsyncpa [#allocation4], 0
    // Predicated region
    $region2: #{tpu_custom_call.1} parent=1 // pred_check
      _
    $region3: #{tpu_custom_call.1} parent=1 // pred_check_branch
      %15 = sbr.rel (0) target = $region5
    $region4: #{tpu_custom_call.1} parent=1 // pred_region
      _
    $region5: #{tpu_custom_call.1} parent=1 // pred_fallthru
      _
    // Predicated region
    $region6: #{tpu_custom_call.1} parent=1 // pred_check
      _
    $region7: #{tpu_custom_call.1} parent=1 // pred_check_branch
      %17 = sbr.rel (0) target = $region9
    $region8: #{tpu_custom_call.1} parent=1 // pred_region
      %s19 = ssub.s32 128, 128
      %20 = vsyncadd [#allocation3], %s19
      %s21 = sshll.u32 [#allocation2], 4
      %s22 = int_to_ptr.vmem [resolvable:$true] %s21
      %27 = dma.hbm_to_vmem [thread:$0]  %s1, 128, %s22, [#allocation3], 64, 64, 4
    $region9: #{tpu_custom_call.1} parent=1 // pred_fallthru
      _
    // Predicated region
    $region10: #{tpu_custom_call.1} parent=1 // pred_check
      _
    $region11: #{tpu_custom_call.1} parent=1 // pred_check_branch
      %29 = sbr.rel (0) target = $region13
    $region12: #{tpu_custom_call.1} parent=1 // pred_region
      %s31 = ssub.s32 2048, 2048
      %32 = vsyncadd [#allocation6], %s31
      %s33 = sshll.u32 [#allocation5], 4
      %s34 = int_to_ptr.vmem [resolvable:$true] %s33
      %39 = dma.hbm_to_vmem [thread:$0]  %s2, 2048, %s34, [#allocation6], 64, 64, 4
    $region13: #{tpu_custom_call.1} parent=1 // pred_fallthru
      _
    // Predicated region
    $region14: #{tpu_custom_call.1} parent=1 // pred_check
      _
    $region15: #{tpu_custom_call.1} parent=1 // pred_check_branch
      %41 = sbr.rel (0) target = $region17
    $region16: #{tpu_custom_call.1} parent=1 // pred_region
      %s43 = ssub.s32 64, 64
      %44 = vsyncadd [#allocation6], %s43
      %s46 = sshll.u32 [#allocation7], 4
      %s47 = int_to_ptr.vmem [resolvable:$true] %s46
      %49 = dma.hbm_to_vmem [thread:$0]  %s3, 64, %s47, [#allocation6]
    $region17: #{tpu_custom_call.1} parent=1 // pred_fallthru
      _
    // Predicated region
    $region18: #{tpu_custom_call.1} parent=1 // pred_check
      _
    $region19: #{tpu_custom_call.1} parent=1 // pred_check_branch
      %51 = sbr.rel (0) target = $region21
    $region20: #{tpu_custom_call.1} parent=1 // pred_region
      _
    $region21: #{tpu_custom_call.1} parent=1 // pred_fallthru
      _
    // Predicated region
    $region22: #{tpu_custom_call.1} parent=1 // pred_check
      _
    $region23: #{tpu_custom_call.1} parent=1 // pred_check_branch
      %53 = sbr.rel (0) target = $region25
    $region24: #{tpu_custom_call.1} parent=1 // pred_region
      _
    $region25: #{tpu_custom_call.1} parent=1 // pred_fallthru
      _
    // Predicated region
    $region26: #{tpu_custom_call.1} parent=1 // pred_check
      _
    $region27: #{tpu_custom_call.1} parent=1 // pred_check_branch
      %55 = sbr.rel (0) target = $region29
    $region28: #{tpu_custom_call.1} parent=1 // pred_region
      %56 = dma.done [#allocation3], 128
    $region29: #{tpu_custom_call.1} parent=1 // pred_fallthru
      _
    // Predicated region
    $region30: #{tpu_custom_call.1} parent=1 // pred_check
      _
    $region31: #{tpu_custom_call.1} parent=1 // pred_check_branch
      %58 = sbr.rel (0) target = $region33
    $region32: #{tpu_custom_call.1} parent=1 // pred_region
      %59 = dma.done [#allocation6], 2048
    $region33: #{tpu_custom_call.1} parent=1 // pred_fallthru
      _
    // Predicated region
    $region34: #{tpu_custom_call.1} parent=1 // pred_check
      _
    $region35: #{tpu_custom_call.1} parent=1 // pred_check_branch
      %61 = sbr.rel (0) target = $region37
    $region36: #{tpu_custom_call.1} parent=1 // pred_region
      %62 = dma.done [#allocation6], 64
    $region37: #{tpu_custom_call.1} parent=1 // pred_fallthru
      _
    %v64 = vld [vmem:[%s0] sm:$0xff]
    %v65 = vpack.c.bf16 %v64, %v64
    %v66 = vld [vmem:[#allocation2] sm:$0xf]
    %v67 = vld [vmem:[#allocation2 + $0x4] sm:$0xf]
    %v68 = vld [vmem:[#allocation7] sm:$0x1]
    %v69 = vlaneseq
    %v70 = vshrl.u32 %v69, 7
    %v71 = vsub.s32 0, %v70
    %v72 = vrot.slane %v68, %v71
    %v75 = vunpack.c.l.b16 %v66
    %v76 = vunpack.c.l.b16 %v67
    %v77 = vpack.c.b16 %v76, %v75
    %vm79 = vcmask 130048
    %v81 = vsel %vm79, %v65, 0
    %83 = vmatprep.subr.bf16.mxu0 0
    %84 = vmatpush1.bf16.msra.mxu0 0
    %85 = vmatprep.subr.bf16.mxu0 0
    %86 = vmatpush1.bf16.msra.mxu0 0
    %87 = vmatprep.subr.bf16.mxu0 0
    %88 = vmatpush1.bf16.msra.mxu0 0
    %89 = vmatprep.subr.bf16.mxu0 0
    %90 = vmatpush1.bf16.msra.mxu0 0
    %91 = vmatprep.subr.bf16.mxu0 0
    %92 = vmatpush1.bf16.msra.mxu0 0
    %93 = vmatprep.subr.bf16.mxu0 0
    %94 = vmatpush1.bf16.msra.mxu0 0
    %95 = vmatprep.subr.bf16.mxu0 0
    %96 = vmatpush1.bf16.msra.mxu0 0
    %97 = vmatprep.subr.bf16.mxu0 0
    %98 = vmatpush1.bf16.msra.mxu0 %v77
    %99 = vmatprep.subr.bf16.mxu0 0
    %100 = vmatpush2.bf16.msra.mxu0 0
    %101 = vmatprep.subr.bf16.mxu0 0
    %102 = vmatpush2.bf16.msra.mxu0 0
    %103 = vmatprep.subr.bf16.mxu0 0
    %104 = vmatpush2.bf16.msra.mxu0 0
    %105 = vmatprep.subr.bf16.mxu0 0
    %106 = vmatpush2.bf16.msra.mxu0 0
    %107 = vmatprep.subr.bf16.mxu0 0
    %108 = vmatpush2.bf16.msra.mxu0 0
    %109 = vmatprep.subr.bf16.mxu0 0
    %110 = vmatpush2.bf16.msra.mxu0 0
    %111 = vmatprep.subr.bf16.mxu0 0
    %112 = vmatpush2.bf16.msra.mxu0 0
    %113 = vmatprep.subr.bf16.mxu0 0
    %114 = vmatpush2.bf16.msra.mxu0 0
    %115 = vmatprep.mubr.bf16.mxu0 0
    %116 = vmatmul.mubr.bf16.gmra.mxu0 %v81
    %v117 = vpop.f32.mrf.mxu0
    %v118 = vadd.f32 %v72, %v117
    %v119 = vpop.f32.mrf.mxu0
    %v120 = vpop.f32.mrf.mxu0
    %v121 = vpop.f32.mrf.mxu0
    %122 = vdwg.mxu0
    %v123 = vmax.f32 %v118, 0.0
    %v124 = vpack.c.bf16 %v123, %v123
    %v125 = vld [vmem:[#allocation5] sm:$0xf]
    %v126 = vld [vmem:[#allocation5 + $0x4] sm:$0xf]
    %v127 = vld [vmem:[#allocation5 + $0x8] sm:$0xf]
    %v128 = vld [vmem:[#allocation5 + $0xc] sm:$0xf]
    %v129 = vld [vmem:[#allocation5 + $0x10] sm:$0xf]
    %v130 = vld [vmem:[#allocation5 + $0x14] sm:$0xf]
    %v131 = vld [vmem:[#allocation5 + $0x18] sm:$0xf]
    %v132 = vld [vmem:[#allocation5 + $0x1c] sm:$0xf]
    %v133 = vld [vmem:[#allocation5 + $0x20] sm:$0xf]
    %v134 = vld [vmem:[#allocation5 + $0x24] sm:$0xf]
    %v135 = vld [vmem:[#allocation5 + $0x28] sm:$0xf]
    %v136 = vld [vmem:[#allocation5 + $0x2c] sm:$0xf]
    %v137 = vld [vmem:[#allocation5 + $0x30] sm:$0xf]
    %v138 = vld [vmem:[#allocation5 + $0x34] sm:$0xf]
    %v139 = vld [vmem:[#allocation5 + $0x38] sm:$0xf]
    %v140 = vld [vmem:[#allocation5 + $0x3c] sm:$0xf]
    %v141 = vld [vmem:[#allocation7 + $0x1] sm:$0x1]
    %v142 = vlaneseq
    %v143 = vshrl.u32 %v142, 7
    %v144 = vsub.s32 0, %v143
    %v145 = vrot.slane %v141, %v144
    %v162 = vunpack.c.l.b16 %v125
    %v163 = vunpack.c.l.b16 %v126
    %v164 = vunpack.c.l.b16 %v127
    %v165 = vunpack.c.l.b16 %v128
    %v166 = vunpack.c.l.b16 %v129
    %v167 = vunpack.c.l.b16 %v130
    %v168 = vunpack.c.l.b16 %v131
    %v169 = vunpack.c.l.b16 %v132
    %v170 = vunpack.c.l.b16 %v133
    %v171 = vunpack.c.l.b16 %v134
    %v172 = vunpack.c.l.b16 %v135
    %v173 = vunpack.c.l.b16 %v136
    %v174 = vunpack.c.l.b16 %v137
    %v175 = vunpack.c.l.b16 %v138
    %v176 = vunpack.c.l.b16 %v139
    %v177 = vunpack.c.l.b16 %v140
    %v178 = vpack.c.b16 %v163, %v162
    %v179 = vpack.c.b16 %v165, %v164
    %v180 = vpack.c.b16 %v167, %v166
    %v181 = vpack.c.b16 %v169, %v168
    %v182 = vpack.c.b16 %v171, %v170
    %v183 = vpack.c.b16 %v173, %v172
    %v184 = vpack.c.b16 %v175, %v174
    %v185 = vpack.c.b16 %v177, %v176
    %194 = vmatprep.subr.bf16.mxu0 0
    %195 = vmatpush1.bf16.msra.mxu0 %v185
    %196 = vmatprep.subr.bf16.mxu0 0
    %197 = vmatpush1.bf16.msra.mxu0 %v184
    %198 = vmatprep.subr.bf16.mxu0 0
    %199 = vmatpush1.bf16.msra.mxu0 %v183
    %200 = vmatprep.subr.bf16.mxu0 0
    %201 = vmatpush1.bf16.msra.mxu0 %v182
    %202 = vmatprep.subr.bf16.mxu0 0
    %203 = vmatpush1.bf16.msra.mxu0 %v181
    %204 = vmatprep.subr.bf16.mxu0 0
    %205 = vmatpush1.bf16.msra.mxu0 %v180
    %206 = vmatprep.subr.bf16.mxu0 0
    %207 = vmatpush1.bf16.msra.mxu0 %v179
    %208 = vmatprep.subr.bf16.mxu0 0
    %209 = vmatpush1.bf16.msra.mxu0 %v178
    %210 = vmatprep.subr.bf16.mxu0 0
    %211 = vmatpush2.bf16.msra.mxu0 0
    %212 = vmatprep.subr.bf16.mxu0 0
    %213 = vmatpush2.bf16.msra.mxu0 0
    %214 = vmatprep.subr.bf16.mxu0 0
    %215 = vmatpush2.bf16.msra.mxu0 0
    %216 = vmatprep.subr.bf16.mxu0 0
    %217 = vmatpush2.bf16.msra.mxu0 0
    %218 = vmatprep.subr.bf16.mxu0 0
    %219 = vmatpush2.bf16.msra.mxu0 0
    %220 = vmatprep.subr.bf16.mxu0 0
    %221 = vmatpush2.bf16.msra.mxu0 0
    %222 = vmatprep.subr.bf16.mxu0 0
    %223 = vmatpush2.bf16.msra.mxu0 0
    %224 = vmatprep.subr.bf16.mxu0 0
    %225 = vmatpush2.bf16.msra.mxu0 0
    %226 = vmatprep.mubr.bf16.mxu0 0
    %227 = vmatmul.mubr.bf16.gmra.mxu0 %v124
    %v228 = vpop.f32.mrf.mxu0
    %v229 = vadd.f32 %v145, %v228
    %v230 = vpop.f32.mrf.mxu0
    %v231 = vpop.f32.mrf.mxu0
    %v232 = vpop.f32.mrf.mxu0
    %233 = vdwg.mxu0
    %v234 = vmax.f32 %v229, 0.0
    %v235 = vpack.c.bf16 %v234, %v234
    %s236 = scalar_lea.vmem [#allocation5], 64
    %v237 = vld [vmem:[%s236] sm:$0xf]
    %v238 = vld [vmem:[%s236 + $0x4] sm:$0xf]
    %v239 = vld [vmem:[%s236 + $0x8] sm:$0xf]
    %v240 = vld [vmem:[%s236 + $0xc] sm:$0xf]
    %v241 = vld [vmem:[%s236 + $0x10] sm:$0xf]
    %v242 = vld [vmem:[%s236 + $0x14] sm:$0xf]
    %v243 = vld [vmem:[%s236 + $0x18] sm:$0xf]
    %v244 = vld [vmem:[%s236 + $0x1c] sm:$0xf]
    %v245 = vld [vmem:[%s236 + $0x20] sm:$0xf]
    %v246 = vld [vmem:[%s236 + $0x24] sm:$0xf]
    %v247 = vld [vmem:[%s236 + $0x28] sm:$0xf]
    %v248 = vld [vmem:[%s236 + $0x2c] sm:$0xf]
    %v249 = vld [vmem:[%s236 + $0x30] sm:$0xf]
    %v250 = vld [vmem:[%s236 + $0x34] sm:$0xf]
    %v251 = vld [vmem:[%s236 + $0x38] sm:$0xf]
    %v252 = vld [vmem:[%s236 + $0x3c] sm:$0xf]
    %v253 = vld [vmem:[#allocation7 + $0x2] sm:$0x1]
    %v254 = vlaneseq
    %v255 = vshrl.u32 %v254, 7
    %v256 = vsub.s32 0, %v255
    %v257 = vrot.slane %v253, %v256
    %v274 = vunpack.c.l.b16 %v237
    %v275 = vunpack.c.l.b16 %v238
    %v276 = vunpack.c.l.b16 %v239
    %v277 = vunpack.c.l.b16 %v240
    %v278 = vunpack.c.l.b16 %v241
    %v279 = vunpack.c.l.b16 %v242
    %v280 = vunpack.c.l.b16 %v243
    %v281 = vunpack.c.l.b16 %v244
    %v282 = vunpack.c.l.b16 %v245
    %v283 = vunpack.c.l.b16 %v246
    %v284 = vunpack.c.l.b16 %v247
    %v285 = vunpack.c.l.b16 %v248
    %v286 = vunpack.c.l.b16 %v249
    %v287 = vunpack.c.l.b16 %v250
    %v288 = vunpack.c.l.b16 %v251
    %v289 = vunpack.c.l.b16 %v252
    %v290 = vpack.c.b16 %v275, %v274
    %v291 = vpack.c.b16 %v277, %v276
    %v292 = vpack.c.b16 %v279, %v278
    %v293 = vpack.c.b16 %v281, %v280
    %v294 = vpack.c.b16 %v283, %v282
    %v295 = vpack.c.b16 %v285, %v284
    %v296 = vpack.c.b16 %v287, %v286
    %v297 = vpack.c.b16 %v289, %v288
    %306 = vmatprep.subr.bf16.mxu0 0
    %307 = vmatpush1.bf16.msra.mxu0 %v297
    %308 = vmatprep.subr.bf16.mxu0 0
    %309 = vmatpush1.bf16.msra.mxu0 %v296
    %310 = vmatprep.subr.bf16.mxu0 0
    %311 = vmatpush1.bf16.msra.mxu0 %v295
    %312 = vmatprep.subr.bf16.mxu0 0
    %313 = vmatpush1.bf16.msra.mxu0 %v294
    %314 = vmatprep.subr.bf16.mxu0 0
    %315 = vmatpush1.bf16.msra.mxu0 %v293
    %316 = vmatprep.subr.bf16.mxu0 0
    %317 = vmatpush1.bf16.msra.mxu0 %v292
    %318 = vmatprep.subr.bf16.mxu0 0
    %319 = vmatpush1.bf16.msra.mxu0 %v291
    %320 = vmatprep.subr.bf16.mxu0 0
    %321 = vmatpush1.bf16.msra.mxu0 %v290
    %322 = vmatprep.subr.bf16.mxu0 0
    %323 = vmatpush2.bf16.msra.mxu0 0
    %324 = vmatprep.subr.bf16.mxu0 0
    %325 = vmatpush2.bf16.msra.mxu0 0
    %326 = vmatprep.subr.bf16.mxu0 0
    %327 = vmatpush2.bf16.msra.mxu0 0
    %328 = vmatprep.subr.bf16.mxu0 0
    %329 = vmatpush2.bf16.msra.mxu0 0
    %330 = vmatprep.subr.bf16.mxu0 0
    %331 = vmatpush2.bf16.msra.mxu0 0
    %332 = vmatprep.subr.bf16.mxu0 0
    %333 = vmatpush2.bf16.msra.mxu0 0
    %334 = vmatprep.subr.bf16.mxu0 0
    %335 = vmatpush2.bf16.msra.mxu0 0
    %336 = vmatprep.subr.bf16.mxu0 0
    %337 = vmatpush2.bf16.msra.mxu0 0
    %338 = vmatprep.mubr.bf16.mxu0 0
    %339 = vmatmul.mubr.bf16.gmra.mxu0 %v235
    %v340 = vpop.f32.mrf.mxu0
    %v341 = vadd.f32 %v257, %v340
    %v342 = vpop.f32.mrf.mxu0
    %v343 = vpop.f32.mrf.mxu0
    %v344 = vpop.f32.mrf.mxu0
    %345 = vdwg.mxu0
    %v346 = vmax.f32 %v341, 0.0
    %v347 = vld [vmem:[%s4] sm:$0xff]
    %v348 = vld [vmem:[%s5] sm:$0xff]
    %350 = vset.pattern.permute.xlu0 0
    %351 = vperm.xlu0 %350, %v348
    %v352 = vpop.permute.xlu0 %351
    %354 = vmatprep.subr.mxu0 0.0
    %355 = vmatpush1.xpose.msra.mxu0 0.0
    %356 = vmatprep.subr.mxu0 0.0
    %357 = vmatpush1.xpose.msra.mxu0 0.0
    %358 = vmatprep.subr.mxu0 0.0
    %359 = vmatpush1.xpose.msra.mxu0 0.0
    %360 = vmatprep.subr.mxu0 0.0
    %361 = vmatpush1.xpose.msra.mxu0 0.0
    %362 = vmatprep.subr.mxu0 0.0
    %363 = vmatpush1.xpose.msra.mxu0 0.0
    %364 = vmatprep.subr.mxu0 0.0
    %365 = vmatpush1.xpose.msra.mxu0 0.0
    %366 = vmatprep.subr.mxu0 0.0
    %367 = vmatpush1.xpose.msra.mxu0 0.0
    %368 = vmatprep.subr.mxu0 0.0
    %369 = vmatpush1.xpose.msra.mxu0 0.0
    %370 = vmatprep.subr.mxu0 0.0
    %371 = vmatpush1.xpose.msra.mxu0 0.0
    %372 = vmatprep.subr.mxu0 0.0
    %373 = vmatpush1.xpose.msra.mxu0 0.0
    %374 = vmatprep.subr.mxu0 0.0
    %375 = vmatpush1.xpose.msra.mxu0 0.0
    %376 = vmatprep.subr.mxu0 0.0
    %377 = vmatpush1.xpose.msra.mxu0 0.0
    %378 = vmatprep.subr.mxu0 0.0
    %379 = vmatpush1.xpose.msra.mxu0 0.0
    %380 = vmatprep.subr.mxu0 0.0
    %381 = vmatpush1.xpose.msra.mxu0 0.0
    %382 = vmatprep.subr.mxu0 0.0
    %383 = vmatpush1.xpose.msra.mxu0 0.0
    %384 = vmatprep.subr.mxu0 0.0
    %385 = vmatpush1.xpose.msra.mxu0 %v346
    %386 = vmatprep.subr.mxu0 0.0
    %387 = vmatpush2.xpose.msra.mxu0 0.0
    %388 = vmatprep.subr.mxu0 0.0
    %389 = vmatpush2.xpose.msra.mxu0 0.0
    %390 = vmatprep.subr.mxu0 0.0
    %391 = vmatpush2.xpose.msra.mxu0 0.0
    %392 = vmatprep.subr.mxu0 0.0
    %393 = vmatpush2.xpose.msra.mxu0 0.0
    %394 = vmatprep.subr.mxu0 0.0
    %395 = vmatpush2.xpose.msra.mxu0 0.0
    %396 = vmatprep.subr.mxu0 0.0
    %397 = vmatpush2.xpose.msra.mxu0 0.0
    %398 = vmatprep.subr.mxu0 0.0
    %399 = vmatpush2.xpose.msra.mxu0 0.0
    %400 = vmatprep.subr.mxu0 0.0
    %401 = vmatpush2.xpose.msra.mxu0 0.0
    %402 = vmatprep.subr.mxu0 0.0
    %403 = vmatpush2.xpose.msra.mxu0 0.0
    %404 = vmatprep.subr.mxu0 0.0
    %405 = vmatpush2.xpose.msra.mxu0 0.0
    %406 = vmatprep.subr.mxu0 0.0
    %407 = vmatpush2.xpose.msra.mxu0 0.0
    %408 = vmatprep.subr.mxu0 0.0
    %409 = vmatpush2.xpose.msra.mxu0 0.0
    %410 = vmatprep.subr.mxu0 0.0
    %411 = vmatpush2.xpose.msra.mxu0 0.0
    %412 = vmatprep.subr.mxu0 0.0
    %413 = vmatpush2.xpose.msra.mxu0 0.0
    %414 = vmatprep.subr.mxu0 0.0
    %415 = vmatpush2.xpose.msra.mxu0 0.0
    %416 = vmatprep.subr.mxu0 0.0
    %417 = vmatpush2.xpose.msra.mxu0 0.0
    %418 = vmatprep.mubr.f32.mxu0 0.0
    %419 = vmatmul.mubr.f32.gmra.mxu0 %v347
    %v420 = vpop.f32.mrf.mxu0
    %v421 = vadd.f32 %v352, %v420
    %v422 = vpop.f32.mrf.mxu0
    %423 = vdwg.mxu0
    %vm424 = vcmask 64512
    %425 = vst.msk [vmem:[#allocation8] sm:$0xff] %vm424, %v421
    // Predicated region
    $region38: #{tpu_custom_call.1} parent=1 // pred_check
      _
    $region39: #{tpu_custom_call.1} parent=1 // pred_check_branch
      %427 = sbr.rel (0) target = $region41
    $region40: #{tpu_custom_call.1} parent=1 // pred_region
      %s429 = ssub.s32 128, 128
      %430 = vsyncadd [#allocation4], %s429
      %s432 = sshll.u32 [#allocation8], 4
      %s433 = int_to_ptr.vmem [resolvable:$true] %s432
      %435 = dma.vmem_to_hbm [thread:$0]  %s433, 128, %s6, [#allocation4]
    $region41: #{tpu_custom_call.1} parent=1 // pred_fallthru
      _
    // Predicated region
    $region42: #{tpu_custom_call.1} parent=1 // pred_check
      _
    $region43: #{tpu_custom_call.1} parent=1 // pred_check_branch
      %437 = sbr.rel (0) target = $region45
    $region44: #{tpu_custom_call.1} parent=1 // pred_region
      %438 = dma.done [#allocation4], 128
    $region45: #{tpu_custom_call.1} parent=1 // pred_fallthru
      _
    %439 = vsyncpa [#allocation3], 1
    %440 = vsyncpa [#allocation6], 1
    %441 = vsyncpa [#allocation4], 1

</llo_original>
